<compile_context>
chip_gen: v7x
topology: tpu7x:2x2x1
jax: 0.10.0
libtpu: 0.0.40
codegen_flags: <defaults>
</compile_context>

<pallas_src>
import functools
import re

import jax
import jax.numpy as jnp
from jax.experimental import pallas as pl
from jax.experimental.pallas import tpu as pltpu


def _gaussian_kernel(scale_ref, x_ref, o_ref, *, exp_dtype):
    # scale_ref: (1, 1) f32 scalar in SMEM holding -1/(2*w*w).
    # x_ref / o_ref: (BR, COLS) VMEM tiles in the array's native dtype.
    neg_inv = scale_ref[0, 0]
    x32 = x_ref[...].astype(jnp.float32)           # f32 squaring (v5e-safe, accurate)
    arg = x32 * x32 * neg_inv                      # VPU muls
    o_ref[...] = jnp.exp(arg.astype(exp_dtype)).astype(o_ref.dtype)   # EUP exp


def _sublane_granule(dtype):
    # second-to-last block dim granule: 8 for 4-byte, 16 for 2-byte, 32 for 1-byte
    return {4: 8, 2: 16, 1: 32}.get(jnp.dtype(dtype).itemsize, 8)


@functools.lru_cache(maxsize=1)
def _tpu_params():
    """(generation, has 2 TCs behind one device, per-tile byte budget)."""
    try:
        kind = jax.devices()[0].device_kind.lower()
    except Exception:
        kind = ""
    m = re.search(r"(\d+)", kind)
    gen = int(m.group(1)) if m else 6
    multi_tc = (gen >= 7) or (gen == 4) or ("v5p" in kind)   # megacore-style chips
    # 4 MiB tiles double-buffered (in+out) = 16 MiB, within v6e/v7x scoped-VMEM
    # defaults; v5e's default is only 16 MiB, so stay at 2 MiB there.
    tile_bytes = (4 << 20) if gen >= 6 else (2 << 20)
    return gen, multi_tc, tile_bytes


def _launch_flat(xf, scale, cols, dtype, gen, multi_tc, tile_bytes):
    """Run the Gaussian kernel over a flat array whose length divides `cols`."""
    n = xf.shape[0]
    rows = n // cols
    x2d = xf.reshape(rows, cols)                   # layout-preserving reshape
    sub = _sublane_granule(dtype)
    itemsize = jnp.dtype(dtype).itemsize

    if rows <= sub:
        br = rows                                  # full-extent block (tiny input)
    else:
        # Byte-budgeted block rows: keep tile bytes ~constant regardless of cols.
        budget_rows = max(sub, (tile_bytes // (cols * itemsize)) // sub * sub)
        br = min(budget_rows, (rows // sub) * sub)
        # Megacore split: only on 2-TC chips and only when the stream is large
        # enough that an extra grid step is noise; round the half point UP so
        # the grid is exactly two (roughly balanced) blocks.
        if (multi_tc and n * itemsize >= (1 << 20)
                and pl.cdiv(rows, br) < 2 and rows >= 2 * sub):
            br = min(br, max(sub, pl.cdiv((rows + 1) // 2, sub) * sub))
    grid_m = pl.cdiv(rows, br)                     # boundary block (if any) is clipped

    # bf16-native exp on v6e/v7x (EUP is bf16-capable there); f32 exp otherwise.
    exp_dtype = jnp.bfloat16 if (dtype == jnp.bfloat16 and gen >= 6) else jnp.float32
    kernel = functools.partial(_gaussian_kernel, exp_dtype=exp_dtype)

    out2d = pl.pallas_call(
        kernel,
        out_shape=jax.ShapeDtypeStruct((rows, cols), dtype),
        grid_spec=pltpu.PrefetchScalarGridSpec(
            num_scalar_prefetch=0,
            grid=(grid_m,),
            in_specs=[
                pl.BlockSpec(memory_space=pltpu.SMEM),          # -1/(2*w*w) scalar
                pl.BlockSpec((br, cols), lambda i: (i, 0)),     # x tile
            ],
            out_specs=pl.BlockSpec((br, cols), lambda i: (i, 0)),
        ),
        compiler_params=pltpu.CompilerParams(
            dimension_semantics=("parallel",),
        ),
    )(scale, x2d)
    return out2d.reshape(-1)


def integration_inf_forward(x, w, *, tile_bytes=None,
                            preferred_cols=(1024, 512, 256, 128)):
    """exp(-x*x / (2*w*w)) computed in a Pallas TPU kernel.

    x: any-shape float array (f32/bf16/...).  w: python float or 0-d array.
    tile_bytes: optional override of the per-tile byte budget (testing / tuning).
    """
    orig_shape = x.shape
    dtype = x.dtype
    xf = x.reshape(-1)                    # zero-copy for contiguous inputs
    n = xf.shape[0]
    if n == 0:
        return x                          # nothing to do for empty tensors

    gen, multi_tc, default_tile_bytes = _tpu_params()
    if tile_bytes is None:
        tile_bytes = default_tile_bytes

    w32 = jnp.asarray(w, jnp.float32)
    neg_inv = -1.0 / (2.0 * w32 * w32)
    scale = neg_inv.reshape(1, 1)         # SMEM scalar

    # Happy path: widest lane count that divides n -> zero-copy 2-D view.
    cols = next((c for c in preferred_cols if n % c == 0), None)
    if cols is not None:
        out = _launch_flat(xf, scale, cols, dtype, gen, multi_tc, tile_bytes)
        return out.reshape(orig_shape)

    # Ragged length: stream the 128-aligned prefix through the kernel and finish
    # the <128-element tail in plain JAX (no jnp.pad / out[:n] round trips).
    # TODO(synk): a manual-DMA flat kernel (memory_space=pl.ANY) could also fold
    # the concatenate below back into the single streaming pass.
    main = (n // 128) * 128
    tail = xf[main:]
    t32 = tail.astype(jnp.float32)
    tail_out = jnp.exp(t32 * t32 * neg_inv).astype(dtype)
    if main == 0:
        return tail_out.reshape(orig_shape)          # < 128 elements total
    main_cols = next(c for c in preferred_cols if main % c == 0)
    main_out = _launch_flat(xf[:main], scale, main_cols, dtype, gen, multi_tc,
                            tile_bytes)
    return jnp.concatenate([main_out, tail_out]).reshape(orig_shape)


if __name__ == "__main__":
    key = jax.random.PRNGKey(0)
    k1, k2, k3, k4 = jax.random.split(key, 4)
    w = 1.3   # module parameter (IntegrationInfModule(w))

    def ref(x):
        x32 = x.astype(jnp.float32)
        return jnp.exp(-x32 * x32 / (2.0 * w * w)).astype(x.dtype)

    # 1) Small module-shaped f32 input: zero-copy single-block path.
    x1 = jax.random.normal(k1, (2, 4, 16, 16), dtype=jnp.float32) * 3.0
    o1 = jax.block_until_ready(integration_inf_forward(x1, w))
    assert o1.shape == x1.shape and o1.dtype == x1.dtype
    assert jnp.max(jnp.abs(o1 - ref(x1))) < 1e-5

    # 2) f32 input with a small tile-budget override -> multi-step grid with a
    #    clipped boundary block (exercises the byte-budgeted tiling path).
    x2 = jax.random.normal(k2, (5, 8, 32, 32), dtype=jnp.float32) * 3.0
    o2 = jax.block_until_ready(integration_inf_forward(x2, w, tile_bytes=64 * 1024))
    assert jnp.max(jnp.abs(o2 - ref(x2))) < 1e-5

    # 3) bf16 I/O: native-dtype HBM traffic; on v6e/v7x only the exp argument is
    #    cast to bf16 (f32 squaring), so tolerance reflects bf16 output + bf16 exp.
    x3 = (jax.random.normal(k3, (2, 4, 16, 128), dtype=jnp.float32) * 3.0
          ).astype(jnp.bfloat16)
    o3 = jax.block_until_ready(integration_inf_forward(x3, w))
    assert o3.dtype == jnp.bfloat16 and o3.shape == x3.shape
    d3 = jnp.max(jnp.abs(o3.astype(jnp.float32) - ref(x3).astype(jnp.float32)))
    assert d3 < 3e-2

    # 4) Ragged length (n % 128 != 0): 128-aligned prefix through the kernel,
    #    <128-element tail in plain JAX; no pad/slice round trips.
    x4 = jax.random.normal(k4, (7, 50), dtype=jnp.float32) * 3.0
    o4 = jax.block_until_ready(integration_inf_forward(x4, w))
    assert o4.shape == x4.shape and o4.dtype == x4.dtype
    assert jnp.max(jnp.abs(o4 - ref(x4))) < 1e-5

    print("KERNEL_OK")
</pallas_src>

<mosaic_0001>
module attributes {stable_mosaic.version = 11 : i64} {
  func.func @_gaussian_kernel(%arg0: i32, %arg1: memref<1x1xf32, #tpu.memory_space<smem>>, %arg2: memref<2x1024xf32, #tpu.memory_space<vmem>>, %arg3: memref<2x1024xf32, #tpu.memory_space<vmem>>) attributes {dimension_semantics = [#tpu.dimension_semantics<parallel>], iteration_bounds = array<i64: 1>, scalar_prefetch = 0 : i64, scratch_operands = 0 : i64, tpu.core_type = #tpu.core_type<tc>, window_params = [{transform_indices = @transform_0, window_bounds = array<i64: 1, 1>}, {transform_indices = @transform_1, window_bounds = array<i64: 2, 1024>}, {transform_indices = @transform_2, window_bounds = array<i64: 2, 1024>}]} {
    %c0 = arith.constant 0 : index
    %c0_0 = arith.constant 0 : index
    %0 = memref.load %arg1[%c0, %c0_0] : memref<1x1xf32, #tpu.memory_space<smem>>
    %c0_1 = arith.constant 0 : index
    %c0_2 = arith.constant 0 : index
    %1 = vector.load %arg2[%c0_1, %c0_2] : memref<2x1024xf32, #tpu.memory_space<vmem>>, vector<2x1024xf32>
    %2 = arith.mulf %1, %1 : vector<2x1024xf32>
    %3 = vector.broadcast %0 : f32 to vector<2x1024xf32>
    %4 = arith.mulf %2, %3 : vector<2x1024xf32>
    %5 = math.exp %4 : vector<2x1024xf32>
    %c0_3 = arith.constant 0 : index
    %c0_4 = arith.constant 0 : index
    %6 = vector.load %arg3[%c0_3, %c0_4] : memref<2x1024xf32, #tpu.memory_space<vmem>>, vector<2x1024xf32>
    tpu.vector_store %arg3[%c0_3, %c0_4], %5 {strides = array<i32>} : memref<2x1024xf32, #tpu.memory_space<vmem>>, vector<2x1024xf32>,
    return
  }
  func.func @transform_0(%arg0: i32) -> (i32, i32) {
    %c0_i32 = arith.constant 0 : i32
    %c0_i32_0 = arith.constant 0 : i32
    %c0_i32_1 = arith.constant 0 : i32
    return %c0_i32, %c0_i32_0 : i32, i32
  }
  func.func @transform_1(%arg0: i32) -> (i32, i32) {
    %c0_i32 = arith.constant 0 : i32
    %c0_i32_0 = arith.constant 0 : i32
    return %arg0, %c0_i32 : i32, i32
  }
  func.func @transform_2(%arg0: i32) -> (i32, i32) {
    %c0_i32 = arith.constant 0 : i32
    %c0_i32_0 = arith.constant 0 : i32
    return %arg0, %c0_i32 : i32, i32
  }
}

</mosaic_0001>

<llo_original>
// kernel: tpu_custom_call.1
$region0: #{tpu_custom_call.1}
  #allocation0 [shape = 'u32[]', space=smem, size = 0x4, offset = 0x4, fixed_abs, tag = 'smem constant byte address 0x4 - core index']
  #allocation1 [shape = 'u32[144,128]{1,0:T(1,128)}', space=vmem, size = 0x12000, scoped, tag = 'internal scratch']
  #allocation2 [shape = 'f32[1,1]{1,0:T(1,128)S(6)}', space=smem, size = 0x200, scoped, tag = 'scoped memory for tpu_custom_call.1']
  %s0 = inlined_call_operand.<no memory space> [shape: f32[1,1], index: 0, kind: input, shape index: {}]
  %s1 = inlined_call_operand.hbm [shape: f32[2,1024], index: 1, kind: input, shape index: {}]
  %s2 = inlined_call_operand.hbm [shape: f32[2,1024], index: 2, kind: output, shape index: {}]
  %s3 = sld [smem:[#allocation0]]
  $region22: #{tpu_custom_call.1} parent=0
    _
  %s5 = ssub.s32 1, %s3
  %s6 = scalar_select 0, %s5, %s3
  %7 = sst [smem:[#allocation2]] %s0
  $region1: #{tpu_custom_call.1} parent=0
    #allocation3 [shape = 'u8[8192]{0}', space=vmem, size = 0x2000, scoped, tag = 'input window, operand 1, single buffered']
    #allocation4 [shape = 's32[1]{0}', space=sflag, size = 0x4, scoped, tag = 'scoped memory for tpu_custom_call.1']
    #allocation5 [shape = 's32[1]{0}', space=sflag, size = 0x4, scoped, tag = 'scoped memory for tpu_custom_call.1']
    #allocation6 [shape = 'u8[8192]{0}', space=vmem, size = 0x2000, scoped, tag = 'output window, operand 0, single buffered']
    %8 = vsyncpa [#allocation4], 0
    %9 = vsyncpa [#allocation5], 0
    // Predicated region
    $region2: #{tpu_custom_call.1} parent=1 // pred_check
      _
    $region3: #{tpu_custom_call.1} parent=1 // pred_check_branch
      %11 = sbr.rel (0) target = $region5
    $region4: #{tpu_custom_call.1} parent=1 // pred_region
      _
    $region5: #{tpu_custom_call.1} parent=1 // pred_fallthru
      _
    // Predicated region
    $region6: #{tpu_custom_call.1} parent=1 // pred_check
      _
    $region7: #{tpu_custom_call.1} parent=1 // pred_check_branch
      %13 = sbr.rel (0) target = $region9
    $region8: #{tpu_custom_call.1} parent=1 // pred_region
      %s15 = ssub.s32 256, 256
      %16 = vsyncadd [#allocation4], %s15
      %s18 = sshll.u32 [#allocation3], 4
      %s19 = int_to_ptr.vmem [resolvable:$true] %s18
      %21 = dma.hbm_to_vmem [thread:$0]  %s1, 256, %s19, [#allocation4]
    $region9: #{tpu_custom_call.1} parent=1 // pred_fallthru
      _
    // Predicated region
    $region10: #{tpu_custom_call.1} parent=1 // pred_check
      _
    $region11: #{tpu_custom_call.1} parent=1 // pred_check_branch
      %23 = sbr.rel (0) target = $region13
    $region12: #{tpu_custom_call.1} parent=1 // pred_region
      %24 = dma.done [#allocation4], 256
    $region13: #{tpu_custom_call.1} parent=1 // pred_fallthru
      _
    %s25 = sld [smem:[#allocation2]]
    %v26 = vld [vmem:[#allocation3] sm:$0xff]
    %v27 = vld [vmem:[#allocation3 + $0x8] sm:$0xff]
    %v28 = vmul.f32 %v26, %v26
    %v29 = vmul.f32 %v27, %v27
    %v30 = vstv %s25
    %v31 = vmul.f32 %v28, %v30
    %v32 = vmul.f32 %v29, %v30
    %v33 = vmul.f32 %v31, 1.442695
    %v34 = vpow.pop %v33
    %v35 = vmul.f32 %v32, 1.442695
    %v36 = vpow.pop %v35
    %37 = vst [vmem:[#allocation6] sm:$0xff] %v34
    %38 = vst [vmem:[#allocation6 + $0x8] sm:$0xff] %v36
    // Predicated region
    $region14: #{tpu_custom_call.1} parent=1 // pred_check
      _
    $region15: #{tpu_custom_call.1} parent=1 // pred_check_branch
      %40 = sbr.rel (0) target = $region17
    $region16: #{tpu_custom_call.1} parent=1 // pred_region
      %s42 = ssub.s32 256, 256
      %43 = vsyncadd [#allocation5], %s42
      %s45 = sshll.u32 [#allocation6], 4
      %s46 = int_to_ptr.vmem [resolvable:$true] %s45
      %48 = dma.vmem_to_hbm [thread:$0]  %s46, 256, %s2, [#allocation5]
    $region17: #{tpu_custom_call.1} parent=1 // pred_fallthru
      _
    // Predicated region
    $region18: #{tpu_custom_call.1} parent=1 // pred_check
      _
    $region19: #{tpu_custom_call.1} parent=1 // pred_check_branch
      %50 = sbr.rel (0) target = $region21
    $region20: #{tpu_custom_call.1} parent=1 // pred_region
      %51 = dma.done [#allocation5], 256
    $region21: #{tpu_custom_call.1} parent=1 // pred_fallthru
      _
    %52 = vsyncpa [#allocation4], 1
    %53 = vsyncpa [#allocation5], 1

</llo_original>
